<compile_context>
chip_gen: v5e
topology: v5e:2x2
jax: 0.10.0
libtpu: 0.0.40
codegen_flags: <defaults>
</compile_context>

<pallas_src>
import jax
import jax.numpy as jnp
from jax import lax
from jax.experimental import pallas as pl
from jax.experimental.pallas import tpu as pltpu

BN_EPS = 1e-5
_LANES = 128
_TS_MAX = 16384                   # max spatial tile width (lanes)
_TN_MAX = 8                       # max images per block (static unroll bound)
_BLOCK_BUDGET = 4 * 1024 * 1024   # target bytes for one (input+output) block
_VMEM_LIMIT = 32 * 1024 * 1024    # scoped-VMEM budget; safe on v5e/v6e/v7x


def _round_up(x, m):
    return (x + m - 1) // m * m


# ---------------------------------------------------------------------------
# pass 1: relu -> fused 1x1 convs (block-diag matmul) -> per-channel sum/sumsq
# ---------------------------------------------------------------------------
def _stats_kernel(x_ref, w_ref, sum_ref, ssq_ref):
    # x_ref: (TN, 2*C_in, TS)  w_ref: (C_out, 2*C_in)  sum/ssq_ref: (C_out, 1)
    tn = x_ref.shape[0]
    c_out = w_ref.shape[0]
    w = w_ref[...]
    s_acc = jnp.zeros((c_out, 1), jnp.float32)
    q_acc = jnp.zeros((c_out, 1), jnp.float32)
    for i in range(tn):                                    # static unroll, tn <= 8
        xr = jnp.maximum(x_ref[i], 0.0)                                  # VPU ReLU
        y = jnp.dot(w, xr, preferred_element_type=jnp.float32)          # MXU
        s_acc = s_acc + jnp.sum(y, axis=1, keepdims=True)               # XLU reduce
        q_acc = q_acc + jnp.sum(y * y, axis=1, keepdims=True)
    sum_ref[...] = s_acc
    ssq_ref[...] = q_acc


# ---------------------------------------------------------------------------
# pass 2: recompute y, apply folded BN scale/shift, lane-dense store
# ---------------------------------------------------------------------------
def _apply_kernel(x_ref, w_ref, scale_ref, shift_ref, o_ref):
    # x_ref: (TN, 2*C_in, TS)  scale/shift_ref: (C_out, 1)  o_ref: (TN, C_out, TS)
    tn = x_ref.shape[0]
    w = w_ref[...]
    scale = scale_ref[...]
    shift = shift_ref[...]
    for i in range(tn):                                    # static unroll, tn <= 8
        xr = jnp.maximum(x_ref[i], 0.0)
        y = jnp.dot(w, xr, preferred_element_type=jnp.float32)
        o_ref[i] = (y * scale + shift).astype(o_ref.dtype)


def factorized_reduce(x_nchw, w1, w2, gamma, beta):
    """FactorizedReduce forward (training-mode BatchNorm).

    x_nchw : (N, C_in, H, W) f32
    w1/w2  : (C_out//2, C_in) f32  (PyTorch 1x1 conv weight, trailing 1x1 squeezed)
    gamma/beta : (C_out,) f32
    returns (N, C_out, H//2, W//2) f32
    """
    N, C_in, H, W = x_nchw.shape
    C_half = w1.shape[0]
    C_out = 2 * C_half
    assert H % 2 == 0 and W % 2 == 0, "even H/W required so both branches align"
    Ho, Wo = H // 2, W // 2
    S = Ho * Wo                       # spatial positions per image
    M = N * S                         # BN population size (true, unpadded)

    # ---- pack input: stride-2 subsample, channels-first, spatial on lanes ----
    # TODO(synk): this strided subsample + channel concat is still one fused XLA
    # gather/copy pass over x in HBM; fully fusing it into the kernel needs a
    # minor-dim stride-2 DMA which BlockSpec does not express cleanly.
    x1 = x_nchw[:, :, 0::2, 0::2]                      # branch 1: offsets (0, 0)
    x2 = x_nchw[:, :, 1::2, 1::2]                      # branch 2: offsets (1, 1)
    xt = jnp.concatenate([x1, x2], axis=1).reshape(N, 2 * C_in, S)

    # ---- budget-driven tiling (zero padding is stats-neutral, see header) ----
    row_bytes = (2 * C_in + C_out) * 4                 # in+out bytes per lane column
    S_pad = _round_up(S, _LANES)
    ts_budget = max(_LANES, (_BLOCK_BUDGET // row_bytes) // _LANES * _LANES)
    TS = min(S_pad, _TS_MAX, ts_budget)
    S_pad = _round_up(S_pad, TS)
    G = S_pad // TS
    TN = int(max(1, min(N, _TN_MAX, _BLOCK_BUDGET // (row_bytes * TS))))
    N_pad = _round_up(N, TN)
    NB = N_pad // TN

    if S_pad != S or N_pad != N:
        xt = jnp.pad(xt, ((0, N_pad - N), (0, 0), (0, S_pad - S)))

    # ---- fused block-diagonal weight: y = W_bd @ [x1_channels ; x2_channels] --
    zeros = jnp.zeros((C_half, C_in), dtype=w1.dtype)
    w_bd = jnp.concatenate(
        [jnp.concatenate([w1, zeros], axis=1),
         jnp.concatenate([zeros, w2], axis=1)], axis=0)    # (C_out, 2*C_in)

    cparams = pltpu.CompilerParams(
        dimension_semantics=("parallel", "parallel"),
        vmem_limit_bytes=_VMEM_LIMIT)

    x_spec = pl.BlockSpec((TN, 2 * C_in, TS), lambda n, s: (n, 0, s))
    w_spec = pl.BlockSpec((C_out, 2 * C_in), lambda n, s: (0, 0))

    elems = N_pad * S_pad
    stats_cost = pl.CostEstimate(
        flops=2 * C_out * 2 * C_in * elems + 3 * C_out * elems,
        transcendentals=0,
        bytes_accessed=4 * (xt.size + w_bd.size + 2 * NB * G * C_out))

    part_sum, part_ssq = pl.pallas_call(
        _stats_kernel,
        out_shape=(jax.ShapeDtypeStruct((NB, G, C_out, 1), jnp.float32),
                   jax.ShapeDtypeStruct((NB, G, C_out, 1), jnp.float32)),
        grid=(NB, G),
        in_specs=[x_spec, w_spec],
        out_specs=(pl.BlockSpec((None, None, C_out, 1), lambda n, s: (n, s, 0, 0)),
                   pl.BlockSpec((None, None, C_out, 1), lambda n, s: (n, s, 0, 0))),
        compiler_params=cparams,
        cost_estimate=stats_cost,
    )(xt, w_bd)

    # ---- finalize BN stats and fold gamma/beta (tiny, plain JAX) -------------
    m = jnp.float32(M)
    mean = jnp.sum(part_sum, axis=(0, 1)) / m                       # (C_out, 1)
    var = jnp.maximum(jnp.sum(part_ssq, axis=(0, 1)) / m - mean * mean, 0.0)
    scale = gamma.reshape(C_out, 1) * lax.rsqrt(var + BN_EPS)       # (C_out, 1)
    shift = beta.reshape(C_out, 1) - mean * scale

    apply_cost = pl.CostEstimate(
        flops=2 * C_out * 2 * C_in * elems + 2 * C_out * elems,
        transcendentals=0,
        bytes_accessed=4 * (xt.size + w_bd.size + 2 * C_out + N_pad * C_out * S_pad))

    out_p = pl.pallas_call(
        _apply_kernel,
        out_shape=jax.ShapeDtypeStruct((N_pad, C_out, S_pad), jnp.float32),
        grid=(NB, G),
        in_specs=[x_spec, w_spec,
                  pl.BlockSpec((C_out, 1), lambda n, s: (0, 0)),
                  pl.BlockSpec((C_out, 1), lambda n, s: (0, 0))],
        out_specs=pl.BlockSpec((TN, C_out, TS), lambda n, s: (n, 0, s)),
        compiler_params=cparams,
        cost_estimate=apply_cost,
    )(xt, w_bd, scale, shift)

    # (N_pad, C_out, S_pad) -> (N, C_out, Ho, Wo): slice padding, free reshape.
    return out_p[:N, :, :S].reshape(N, C_out, Ho, Wo)


def _reference(x_nchw, w1, w2, gamma, beta):
    """Plain-JAX reference (training-mode BN, biased variance)."""
    x = jnp.maximum(x_nchw, 0.0)
    x1 = x[:, :, 0::2, 0::2]
    x2 = x[:, :, 1::2, 1::2]
    y1 = jnp.einsum("nchw,oc->nohw", x1, w1)
    y2 = jnp.einsum("nchw,oc->nohw", x2, w2)
    y = jnp.concatenate([y1, y2], axis=1)
    mean = jnp.mean(y, axis=(0, 2, 3), keepdims=True)
    var = jnp.mean((y - mean) ** 2, axis=(0, 2, 3), keepdims=True)
    yhat = (y - mean) / jnp.sqrt(var + BN_EPS)
    return yhat * gamma[None, :, None, None] + beta[None, :, None, None]


if __name__ == "__main__":
    # Small shapes consistent with the module: N=2, C_in=4, H=W=16, C_out=8.
    N, C_in, H, W = 2, 4, 16, 16
    C_out = 8

    key = jax.random.PRNGKey(0)
    kx, kw1, kw2 = jax.random.split(key, 3)
    x = jax.random.normal(kx, (N, C_in, H, W), dtype=jnp.float32)

    # PyTorch conv weight shapes (C_out//2, C_in, 1, 1), trailing 1x1 squeezed.
    w1 = jax.random.normal(kw1, (C_out // 2, C_in), dtype=jnp.float32) * 0.1
    w2 = jax.random.normal(kw2, (C_out // 2, C_in), dtype=jnp.float32) * 0.1
    gamma = jnp.ones((C_out,), dtype=jnp.float32)   # BatchNorm affine init
    beta = jnp.zeros((C_out,), dtype=jnp.float32)

    fr = jax.jit(factorized_reduce)
    out = jax.block_until_ready(fr(x, w1, w2, gamma, beta))

    ref = _reference(x, w1, w2, gamma, beta)
    assert out.shape == (N, C_out, H // 2, W // 2), out.shape
    assert jnp.allclose(out, ref, atol=1e-4, rtol=1e-4), (
        float(jnp.max(jnp.abs(out - ref))))

    print("KERNEL_OK")
</pallas_src>

<mosaic_0001>
module attributes {stable_mosaic.version = 11 : i64} {
  func.func @_apply_kernel(%arg0: i32, %arg1: i32, %arg2: memref<2x8x128xf32, #tpu.memory_space<vmem>>, %arg3: memref<8x8xf32, #tpu.memory_space<vmem>>, %arg4: memref<8x1xf32, #tpu.memory_space<vmem>>, %arg5: memref<8x1xf32, #tpu.memory_space<vmem>>, %arg6: memref<2x8x128xf32, #tpu.memory_space<vmem>>) attributes {dimension_semantics = [#tpu.dimension_semantics<parallel>, #tpu.dimension_semantics<parallel>], iteration_bounds = array<i64: 1, 1>, scalar_prefetch = 0 : i64, scratch_operands = 0 : i64, tpu.core_type = #tpu.core_type<tc>, window_params = [{transform_indices = @transform_0, window_bounds = array<i64: 2, 8, 128>}, {pipeline_mode = #tpu.pipeline_mode<synchronous>, transform_indices = @transform_1, window_bounds = array<i64: 8, 8>}, {pipeline_mode = #tpu.pipeline_mode<synchronous>, transform_indices = @transform_2, window_bounds = array<i64: 8, 1>}, {pipeline_mode = #tpu.pipeline_mode<synchronous>, transform_indices = @transform_3, window_bounds = array<i64: 8, 1>}, {transform_indices = @transform_4, window_bounds = array<i64: 2, 8, 128>}]} {
    %c0 = arith.constant 0 : index
    %c0_0 = arith.constant 0 : index
    %0 = vector.load %arg3[%c0, %c0_0] : memref<8x8xf32, #tpu.memory_space<vmem>>, vector<8x8xf32>
    %c0_1 = arith.constant 0 : index
    %c0_2 = arith.constant 0 : index
    %1 = vector.load %arg4[%c0_1, %c0_2] : memref<8x1xf32, #tpu.memory_space<vmem>>, vector<8x1xf32>
    %c0_3 = arith.constant 0 : index
    %c0_4 = arith.constant 0 : index
    %2 = vector.load %arg5[%c0_3, %c0_4] : memref<8x1xf32, #tpu.memory_space<vmem>>, vector<8x1xf32>
    %c0_5 = arith.constant 0 : index
    %c0_6 = arith.constant 0 : index
    %c0_7 = arith.constant 0 : index
    %3 = vector.load %arg2[%c0_5, %c0_6, %c0_7] : memref<2x8x128xf32, #tpu.memory_space<vmem>>, vector<1x8x128xf32>
    %4 = vector.shape_cast %3 : vector<1x8x128xf32> to vector<8x128xf32>
    %cst = arith.constant 0.000000e+00 : f32
    %5 = vector.broadcast %cst : f32 to vector<8x128xf32>
    %6 = arith.maximumf %4, %5 : vector<8x128xf32>
    %cst_8 = arith.constant dense<0.000000e+00> : vector<8x128xf32>
    %7 = tpu.matmul %0, %6, %cst_8 {dimension_numbers = #tpu.dot_dimension_numbers<[1], [0], [0], [1], [0, 0, 1, 1], [], []>} : vector<8x8xf32>, vector<8x128xf32>, vector<8x128xf32> -> vector<8x128xf32>
    %8 = vector.broadcast %1 : vector<8x1xf32> to vector<8x128xf32>
    %9 = arith.mulf %7, %8 : vector<8x128xf32>
    %10 = vector.broadcast %2 : vector<8x1xf32> to vector<8x128xf32>
    %11 = arith.addf %9, %10 : vector<8x128xf32>
    %c0_9 = arith.constant 0 : index
    %c0_10 = arith.constant 0 : index
    %c0_11 = arith.constant 0 : index
    %12 = vector.load %arg6[%c0_9, %c0_10, %c0_11] : memref<2x8x128xf32, #tpu.memory_space<vmem>>, vector<1x8x128xf32>
    %13 = vector.shape_cast %12 : vector<1x8x128xf32> to vector<8x128xf32>
    %14 = vector.shape_cast %11 : vector<8x128xf32> to vector<1x8x128xf32>
    tpu.vector_store %arg6[%c0_9, %c0_10, %c0_11], %14 {strides = array<i32>} : memref<2x8x128xf32, #tpu.memory_space<vmem>>, vector<1x8x128xf32>,
    %c1 = arith.constant 1 : index
    %c0_12 = arith.constant 0 : index
    %c0_13 = arith.constant 0 : index
    %15 = vector.load %arg2[%c1, %c0_12, %c0_13] : memref<2x8x128xf32, #tpu.memory_space<vmem>>, vector<1x8x128xf32>
    %16 = vector.shape_cast %15 : vector<1x8x128xf32> to vector<8x128xf32>
    %cst_14 = arith.constant 0.000000e+00 : f32
    %17 = vector.broadcast %cst_14 : f32 to vector<8x128xf32>
    %18 = arith.maximumf %16, %17 : vector<8x128xf32>
    %cst_15 = arith.constant dense<0.000000e+00> : vector<8x128xf32>
    %19 = tpu.matmul %0, %18, %cst_15 {dimension_numbers = #tpu.dot_dimension_numbers<[1], [0], [0], [1], [0, 0, 1, 1], [], []>} : vector<8x8xf32>, vector<8x128xf32>, vector<8x128xf32> -> vector<8x128xf32>
    %20 = vector.broadcast %1 : vector<8x1xf32> to vector<8x128xf32>
    %21 = arith.mulf %19, %20 : vector<8x128xf32>
    %22 = vector.broadcast %2 : vector<8x1xf32> to vector<8x128xf32>
    %23 = arith.addf %21, %22 : vector<8x128xf32>
    %c1_16 = arith.constant 1 : index
    %c0_17 = arith.constant 0 : index
    %c0_18 = arith.constant 0 : index
    %24 = vector.load %arg6[%c1_16, %c0_17, %c0_18] : memref<2x8x128xf32, #tpu.memory_space<vmem>>, vector<1x8x128xf32>
    %25 = vector.shape_cast %24 : vector<1x8x128xf32> to vector<8x128xf32>
    %26 = vector.shape_cast %23 : vector<8x128xf32> to vector<1x8x128xf32>
    tpu.vector_store %arg6[%c1_16, %c0_17, %c0_18], %26 {strides = array<i32>} : memref<2x8x128xf32, #tpu.memory_space<vmem>>, vector<1x8x128xf32>,
    return
  }
  func.func @transform_0(%arg0: i32, %arg1: i32) -> (i32, i32, i32) {
    %c0_i32 = arith.constant 0 : i32
    %c0_i32_0 = arith.constant 0 : i32
    return %arg0, %c0_i32, %arg1 : i32, i32, i32
  }
  func.func @transform_1(%arg0: i32, %arg1: i32) -> (i32, i32) {
    %c0_i32 = arith.constant 0 : i32
    %c0_i32_0 = arith.constant 0 : i32
    %c0_i32_1 = arith.constant 0 : i32
    return %c0_i32, %c0_i32_0 : i32, i32
  }
  func.func @transform_2(%arg0: i32, %arg1: i32) -> (i32, i32) {
    %c0_i32 = arith.constant 0 : i32
    %c0_i32_0 = arith.constant 0 : i32
    %c0_i32_1 = arith.constant 0 : i32
    return %c0_i32, %c0_i32_0 : i32, i32
  }
  func.func @transform_3(%arg0: i32, %arg1: i32) -> (i32, i32) {
    %c0_i32 = arith.constant 0 : i32
    %c0_i32_0 = arith.constant 0 : i32
    %c0_i32_1 = arith.constant 0 : i32
    return %c0_i32, %c0_i32_0 : i32, i32
  }
  func.func @transform_4(%arg0: i32, %arg1: i32) -> (i32, i32, i32) {
    %c0_i32 = arith.constant 0 : i32
    %c0_i32_0 = arith.constant 0 : i32
    return %arg0, %c0_i32, %arg1 : i32, i32, i32
  }
}

module attributes {stable_mosaic.version = 11 : i64} {
  func.func @_stats_kernel(%arg0: i32, %arg1: i32, %arg2: memref<2x8x128xf32, #tpu.memory_space<vmem>>, %arg3: memref<8x8xf32, #tpu.memory_space<vmem>>, %arg4: memref<1x1x8x1xf32, #tpu.memory_space<vmem>>, %arg5: memref<1x1x8x1xf32, #tpu.memory_space<vmem>>) attributes {dimension_semantics = [#tpu.dimension_semantics<parallel>, #tpu.dimension_semantics<parallel>], iteration_bounds = array<i64: 1, 1>, scalar_prefetch = 0 : i64, scratch_operands = 0 : i64, tpu.core_type = #tpu.core_type<tc>, window_params = [{transform_indices = @transform_0, window_bounds = array<i64: 2, 8, 128>}, {pipeline_mode = #tpu.pipeline_mode<synchronous>, transform_indices = @transform_1, window_bounds = array<i64: 8, 8>}, {transform_indices = @transform_2, window_bounds = array<i64: 1, 1, 8, 1>}, {transform_indices = @transform_3, window_bounds = array<i64: 1, 1, 8, 1>}]} {
    %c0 = arith.constant 0 : index
    %c0_0 = arith.constant 0 : index
    %0 = vector.load %arg3[%c0, %c0_0] : memref<8x8xf32, #tpu.memory_space<vmem>>, vector<8x8xf32>
    %cst = arith.constant 0.000000e+00 : f32
    %1 = vector.broadcast %cst : f32 to vector<8x1xf32>
    %cst_1 = arith.constant 0.000000e+00 : f32
    %2 = vector.broadcast %cst_1 : f32 to vector<8x1xf32>
    %c0_2 = arith.constant 0 : index
    %c0_3 = arith.constant 0 : index
    %c0_4 = arith.constant 0 : index
    %3 = vector.load %arg2[%c0_2, %c0_3, %c0_4] : memref<2x8x128xf32, #tpu.memory_space<vmem>>, vector<1x8x128xf32>
    %4 = vector.shape_cast %3 : vector<1x8x128xf32> to vector<8x128xf32>
    %cst_5 = arith.constant 0.000000e+00 : f32
    %5 = vector.broadcast %cst_5 : f32 to vector<8x128xf32>
    %6 = arith.maximumf %4, %5 : vector<8x128xf32>
    %cst_6 = arith.constant dense<0.000000e+00> : vector<8x128xf32>
    %7 = tpu.matmul %0, %6, %cst_6 {dimension_numbers = #tpu.dot_dimension_numbers<[1], [0], [0], [1], [0, 0, 1, 1], [], []>} : vector<8x8xf32>, vector<8x128xf32>, vector<8x128xf32> -> vector<8x128xf32>
    %cst_7 = arith.constant dense<0.000000e+00> : vector<8xf32>
    %8 = vector.multi_reduction <add>, %7, %cst_7 [1] : vector<8x128xf32> to vector<8xf32>
    %9 = vector.shape_cast %8 : vector<8xf32> to vector<8x1xf32>
    %10 = arith.addf %1, %9 : vector<8x1xf32>
    %11 = arith.mulf %7, %7 : vector<8x128xf32>
    %cst_8 = arith.constant dense<0.000000e+00> : vector<8xf32>
    %12 = vector.multi_reduction <add>, %11, %cst_8 [1] : vector<8x128xf32> to vector<8xf32>
    %13 = vector.shape_cast %12 : vector<8xf32> to vector<8x1xf32>
    %14 = arith.addf %2, %13 : vector<8x1xf32>
    %c1 = arith.constant 1 : index
    %c0_9 = arith.constant 0 : index
    %c0_10 = arith.constant 0 : index
    %15 = vector.load %arg2[%c1, %c0_9, %c0_10] : memref<2x8x128xf32, #tpu.memory_space<vmem>>, vector<1x8x128xf32>
    %16 = vector.shape_cast %15 : vector<1x8x128xf32> to vector<8x128xf32>
    %cst_11 = arith.constant 0.000000e+00 : f32
    %17 = vector.broadcast %cst_11 : f32 to vector<8x128xf32>
    %18 = arith.maximumf %16, %17 : vector<8x128xf32>
    %cst_12 = arith.constant dense<0.000000e+00> : vector<8x128xf32>
    %19 = tpu.matmul %0, %18, %cst_12 {dimension_numbers = #tpu.dot_dimension_numbers<[1], [0], [0], [1], [0, 0, 1, 1], [], []>} : vector<8x8xf32>, vector<8x128xf32>, vector<8x128xf32> -> vector<8x128xf32>
    %cst_13 = arith.constant dense<0.000000e+00> : vector<8xf32>
    %20 = vector.multi_reduction <add>, %19, %cst_13 [1] : vector<8x128xf32> to vector<8xf32>
    %21 = vector.shape_cast %20 : vector<8xf32> to vector<8x1xf32>
    %22 = arith.addf %10, %21 : vector<8x1xf32>
    %23 = arith.mulf %19, %19 : vector<8x128xf32>
    %cst_14 = arith.constant dense<0.000000e+00> : vector<8xf32>
    %24 = vector.multi_reduction <add>, %23, %cst_14 [1] : vector<8x128xf32> to vector<8xf32>
    %25 = vector.shape_cast %24 : vector<8xf32> to vector<8x1xf32>
    %26 = arith.addf %14, %25 : vector<8x1xf32>
    %c0_15 = arith.constant 0 : index
    %c0_16 = arith.constant 0 : index
    %c0_17 = arith.constant 0 : index
    %c0_18 = arith.constant 0 : index
    %27 = vector.load %arg4[%c0_15, %c0_16, %c0_17, %c0_18] : memref<1x1x8x1xf32, #tpu.memory_space<vmem>>, vector<1x1x8x1xf32>
    %28 = vector.shape_cast %27 : vector<1x1x8x1xf32> to vector<8x1xf32>
    %29 = vector.shape_cast %22 : vector<8x1xf32> to vector<1x1x8x1xf32>
    tpu.vector_store %arg4[%c0_15, %c0_16, %c0_17, %c0_18], %29 {strides = array<i32>} : memref<1x1x8x1xf32, #tpu.memory_space<vmem>>, vector<1x1x8x1xf32>,
    %c0_19 = arith.constant 0 : index
    %c0_20 = arith.constant 0 : index
    %c0_21 = arith.constant 0 : index
    %c0_22 = arith.constant 0 : index
    %30 = vector.load %arg5[%c0_19, %c0_20, %c0_21, %c0_22] : memref<1x1x8x1xf32, #tpu.memory_space<vmem>>, vector<1x1x8x1xf32>
    %31 = vector.shape_cast %30 : vector<1x1x8x1xf32> to vector<8x1xf32>
    %32 = vector.shape_cast %26 : vector<8x1xf32> to vector<1x1x8x1xf32>
    tpu.vector_store %arg5[%c0_19, %c0_20, %c0_21, %c0_22], %32 {strides = array<i32>} : memref<1x1x8x1xf32, #tpu.memory_space<vmem>>, vector<1x1x8x1xf32>,
    return
  }
  func.func @transform_0(%arg0: i32, %arg1: i32) -> (i32, i32, i32) {
    %c0_i32 = arith.constant 0 : i32
    %c0_i32_0 = arith.constant 0 : i32
    return %arg0, %c0_i32, %arg1 : i32, i32, i32
  }
  func.func @transform_1(%arg0: i32, %arg1: i32) -> (i32, i32) {
    %c0_i32 = arith.constant 0 : i32
    %c0_i32_0 = arith.constant 0 : i32
    %c0_i32_1 = arith.constant 0 : i32
    return %c0_i32, %c0_i32_0 : i32, i32
  }
  func.func @transform_2(%arg0: i32, %arg1: i32) -> (i32, i32, i32, i32) {
    %c0_i32 = arith.constant 0 : i32
    %c0_i32_0 = arith.constant 0 : i32
    %c0_i32_1 = arith.constant 0 : i32
    return %arg0, %arg1, %c0_i32, %c0_i32_0 : i32, i32, i32, i32
  }
  func.func @transform_3(%arg0: i32, %arg1: i32) -> (i32, i32, i32, i32) {
    %c0_i32 = arith.constant 0 : i32
    %c0_i32_0 = arith.constant 0 : i32
    %c0_i32_1 = arith.constant 0 : i32
    return %arg0, %arg1, %c0_i32, %c0_i32_0 : i32, i32, i32, i32
  }
}

</mosaic_0001>

<llo_original>
// kernel: factorized_reduce.2
$region0: #{factorized_reduce.2}
  #allocation0 [shape = 'u32[]', space=smem, size = 0x4, offset = 0x4, fixed_abs, tag = 'smem constant byte address 0x4 - core index']
  #allocation1 [shape = 'u32[72,128]{1,0:T(1,128)}', space=vmem, size = 0x9000, scoped, tag = 'internal scratch']
  %s0 = inlined_call_operand.vmem [shape: f32[2,8,128], index: 0, kind: input, shape index: {}]
  %s1 = inlined_call_operand.vmem [shape: f32[8,8], index: 1, kind: input, shape index: {}]
  %s2 = inlined_call_operand.vmem [shape: f32[1,1,8,1], index: 2, kind: output, shape index: {0}]
  %s3 = inlined_call_operand.vmem [shape: f32[1,1,8,1], index: 3, kind: output, shape index: {1}]
  %4 = xla_tuple %s2, %s3
  %s5 = sld [smem:[#allocation0]]
  $region26: #{factorized_reduce.2} parent=0
    _
  %s7 = ssub.s32 1, %s5
  %s8 = scalar_select 0, %s7, %s5
  // Predicated region
  $region2: #{factorized_reduce.2} parent=0 // pred_check
    _
  $region3: #{factorized_reduce.2} parent=0 // pred_check_branch
    %10 = sbr.rel (0) target = $region5
  $region4: #{factorized_reduce.2} parent=0 // pred_region
    _
  $region5: #{factorized_reduce.2} parent=0 // pred_fallthru
    _
  // Predicated region
  $region6: #{factorized_reduce.2} parent=0 // pred_check
    _
  $region7: #{factorized_reduce.2} parent=0 // pred_check_branch
    %12 = sbr.rel (0) target = $region9
  $region8: #{factorized_reduce.2} parent=0 // pred_region
    _
  $region9: #{factorized_reduce.2} parent=0 // pred_fallthru
    _
  %v13 = vld [vmem:[%s1] sm:$0xff]
  %v14 = vld [vmem:[%s0] sm:$0xff]
  %v15 = vmax.f32 %v14, 0.0
  %vm16 = vcmask 64512
  %v18 = vsel %vm16, %v13, 0
  %20 = vmatpush.msra.mxu0 0.0
  %21 = vmatpush.msra.mxu0 0.0
  %22 = vmatpush.msra.mxu0 0.0
  %23 = vmatpush.msra.mxu0 0.0
  %24 = vmatpush.msra.mxu0 0.0
  %25 = vmatpush.msra.mxu0 0.0
  %26 = vmatpush.msra.mxu0 0.0
  %27 = vmatpush.msra.mxu0 0.0
  %28 = vmatpush.msra.mxu0 0.0
  %29 = vmatpush.msra.mxu0 0.0
  %30 = vmatpush.msra.mxu0 0.0
  %31 = vmatpush.msra.mxu0 0.0
  %32 = vmatpush.msra.mxu0 0.0
  %33 = vmatpush.msra.mxu0 0.0
  %34 = vmatpush.msra.mxu0 0.0
  %35 = vmatpush.msra.mxu0 %v15
  %36 = vmatmul.f32.gmra.mxu0 %v18
  %v37 = vpop.f32.mrf.mxu0
  %v38 = vadd.f32 0.0, %v37
  %39 = vdwg.mxu0
  %40 = vadd.xlane.f32.xlu0 %v38
  %v41 = vpop.xlane.xlu0 %40
  %v42 = vadd.f32 %v41, 0.0
  %v43 = vmul.f32 %v38, %v38
  %44 = vadd.xlane.f32.xlu0 %v43
  %v45 = vpop.xlane.xlu0 %44
  %v46 = vadd.f32 %v45, 0.0
  %s47 = scalar_lea.vmem %s0, 8
  %v48 = vld [vmem:[%s47] sm:$0xff]
  %v49 = vmax.f32 %v48, 0.0
  %50 = vmatpush.msra.mxu0 0.0
  %51 = vmatpush.msra.mxu0 0.0
  %52 = vmatpush.msra.mxu0 0.0
  %53 = vmatpush.msra.mxu0 0.0
  %54 = vmatpush.msra.mxu0 0.0
  %55 = vmatpush.msra.mxu0 0.0
  %56 = vmatpush.msra.mxu0 0.0
  %57 = vmatpush.msra.mxu0 0.0
  %58 = vmatpush.msra.mxu0 0.0
  %59 = vmatpush.msra.mxu0 0.0
  %60 = vmatpush.msra.mxu0 0.0
  %61 = vmatpush.msra.mxu0 0.0
  %62 = vmatpush.msra.mxu0 0.0
  %63 = vmatpush.msra.mxu0 0.0
  %64 = vmatpush.msra.mxu0 0.0
  %65 = vmatpush.msra.mxu0 %v49
  %66 = vmatmul.f32.gmra.mxu0 %v18
  %v67 = vpop.f32.mrf.mxu0
  %v68 = vadd.f32 0.0, %v67
  %69 = vdwg.mxu0
  %70 = vadd.xlane.f32.xlu0 %v68
  %v71 = vpop.xlane.xlu0 %70
  %v72 = vadd.f32 %v42, %v71
  %v73 = vmul.f32 %v68, %v68
  %74 = vadd.xlane.f32.xlu0 %v73
  %v75 = vpop.xlane.xlu0 %74
  %v76 = vadd.f32 %v46, %v75
  %vm77 = vcmask 7168
  %78 = vst.msk [vmem:[%s2] sm:$0xff] %vm77, %v72
  %79 = vst.msk [vmem:[%s3] sm:$0xff] %vm77, %v76
  // Predicated region
  $region10: #{factorized_reduce.2} parent=0 // pred_check
    _
  $region11: #{factorized_reduce.2} parent=0 // pred_check_branch
    %81 = sbr.rel (0) target = $region13
  $region12: #{factorized_reduce.2} parent=0 // pred_region
    _
  $region13: #{factorized_reduce.2} parent=0 // pred_fallthru
    _
  // Predicated region
  $region14: #{factorized_reduce.2} parent=0 // pred_check
    _
  $region15: #{factorized_reduce.2} parent=0 // pred_check_branch
    %83 = sbr.rel (0) target = $region17
  $region16: #{factorized_reduce.2} parent=0 // pred_region
    _
  $region17: #{factorized_reduce.2} parent=0 // pred_fallthru
    _
  // Predicated region
  $region18: #{factorized_reduce.2} parent=0 // pred_check
    _
  $region19: #{factorized_reduce.2} parent=0 // pred_check_branch
    %85 = sbr.rel (0) target = $region21
  $region20: #{factorized_reduce.2} parent=0 // pred_region
    _
  $region21: #{factorized_reduce.2} parent=0 // pred_fallthru
    _
  // Predicated region
  $region22: #{factorized_reduce.2} parent=0 // pred_check
    _
  $region23: #{factorized_reduce.2} parent=0 // pred_check_branch
    %87 = sbr.rel (0) target = $region25
  $region24: #{factorized_reduce.2} parent=0 // pred_region
    _
  $region25: #{factorized_reduce.2} parent=0 // pred_fallthru
    _

// kernel: factorized_reduce.3
$region0: #{factorized_reduce.3}
  #allocation0 [shape = 'u32[]', space=smem, size = 0x4, offset = 0x4, fixed_abs, tag = 'smem constant byte address 0x4 - core index']
  #allocation1 [shape = 'u32[72,128]{1,0:T(1,128)}', space=vmem, size = 0x9000, scoped, tag = 'internal scratch']
  %s0 = inlined_call_operand.vmem [shape: f32[2,8,128], index: 0, kind: input, shape index: {}]
  %s1 = inlined_call_operand.vmem [shape: f32[8,8], index: 1, kind: input, shape index: {}]
  %s2 = inlined_call_operand.vmem [shape: f32[8,1], index: 2, kind: input, shape index: {}]
  %s3 = inlined_call_operand.vmem [shape: f32[8,1], index: 3, kind: input, shape index: {}]
  %s4 = inlined_call_operand.vmem [shape: f32[2,8,128], index: 4, kind: output, shape index: {}]
  %s5 = sld [smem:[#allocation0]]
  $region26: #{factorized_reduce.3} parent=0
    _
  %s7 = ssub.s32 1, %s5
  %s8 = scalar_select 0, %s7, %s5
  // Predicated region
  $region2: #{factorized_reduce.3} parent=0 // pred_check
    _
  $region3: #{factorized_reduce.3} parent=0 // pred_check_branch
    %10 = sbr.rel (0) target = $region5
  $region4: #{factorized_reduce.3} parent=0 // pred_region
    _
  $region5: #{factorized_reduce.3} parent=0 // pred_fallthru
    _
  // Predicated region
  $region6: #{factorized_reduce.3} parent=0 // pred_check
    _
  $region7: #{factorized_reduce.3} parent=0 // pred_check_branch
    %12 = sbr.rel (0) target = $region9
  $region8: #{factorized_reduce.3} parent=0 // pred_region
    _
  $region9: #{factorized_reduce.3} parent=0 // pred_fallthru
    _
  // Predicated region
  $region10: #{factorized_reduce.3} parent=0 // pred_check
    _
  $region11: #{factorized_reduce.3} parent=0 // pred_check_branch
    %14 = sbr.rel (0) target = $region13
  $region12: #{factorized_reduce.3} parent=0 // pred_region
    _
  $region13: #{factorized_reduce.3} parent=0 // pred_fallthru
    _
  // Predicated region
  $region14: #{factorized_reduce.3} parent=0 // pred_check
    _
  $region15: #{factorized_reduce.3} parent=0 // pred_check_branch
    %16 = sbr.rel (0) target = $region17
  $region16: #{factorized_reduce.3} parent=0 // pred_region
    _
  $region17: #{factorized_reduce.3} parent=0 // pred_fallthru
    _
  %v17 = vld [vmem:[%s1] sm:$0xff]
  %v18 = vld [vmem:[%s2] sm:$0xff]
  %v19 = vld [vmem:[%s3] sm:$0xff]
  %v20 = vld [vmem:[%s0] sm:$0xff]
  %v21 = vmax.f32 %v20, 0.0
  %vm22 = vcmask 64512
  %v24 = vsel %vm22, %v17, 0
  %26 = vmatpush.msra.mxu0 0.0
  %27 = vmatpush.msra.mxu0 0.0
  %28 = vmatpush.msra.mxu0 0.0
  %29 = vmatpush.msra.mxu0 0.0
  %30 = vmatpush.msra.mxu0 0.0
  %31 = vmatpush.msra.mxu0 0.0
  %32 = vmatpush.msra.mxu0 0.0
  %33 = vmatpush.msra.mxu0 0.0
  %34 = vmatpush.msra.mxu0 0.0
  %35 = vmatpush.msra.mxu0 0.0
  %36 = vmatpush.msra.mxu0 0.0
  %37 = vmatpush.msra.mxu0 0.0
  %38 = vmatpush.msra.mxu0 0.0
  %39 = vmatpush.msra.mxu0 0.0
  %40 = vmatpush.msra.mxu0 0.0
  %41 = vmatpush.msra.mxu0 %v21
  %42 = vmatmul.f32.gmra.mxu0 %v24
  %v43 = vpop.f32.mrf.mxu0
  %v44 = vadd.f32 0.0, %v43
  %45 = vdwg.mxu0
  %47 = vset.pattern.permute.xlu0 0
  %48 = vperm.xlu0 %47, %v18
  %v49 = vpop.permute.xlu0 %48
  %v51 = vmul.f32 %v44, %v49
  %53 = vset.pattern.permute.xlu0 0
  %54 = vperm.xlu0 %53, %v19
  %v55 = vpop.permute.xlu0 %54
  %v57 = vadd.f32 %v51, %v55
  %58 = vst [vmem:[%s4] sm:$0xff] %v57
  %s59 = scalar_lea.vmem %s0, 8
  %v60 = vld [vmem:[%s59] sm:$0xff]
  %v61 = vmax.f32 %v60, 0.0
  %62 = vmatpush.msra.mxu0 0.0
  %63 = vmatpush.msra.mxu0 0.0
  %64 = vmatpush.msra.mxu0 0.0
  %65 = vmatpush.msra.mxu0 0.0
  %66 = vmatpush.msra.mxu0 0.0
  %67 = vmatpush.msra.mxu0 0.0
  %68 = vmatpush.msra.mxu0 0.0
  %69 = vmatpush.msra.mxu0 0.0
  %70 = vmatpush.msra.mxu0 0.0
  %71 = vmatpush.msra.mxu0 0.0
  %72 = vmatpush.msra.mxu0 0.0
  %73 = vmatpush.msra.mxu0 0.0
  %74 = vmatpush.msra.mxu0 0.0
  %75 = vmatpush.msra.mxu0 0.0
  %76 = vmatpush.msra.mxu0 0.0
  %77 = vmatpush.msra.mxu0 %v61
  %78 = vmatmul.f32.gmra.mxu0 %v24
  %v79 = vpop.f32.mrf.mxu0
  %v80 = vadd.f32 0.0, %v79
  %81 = vdwg.mxu0
  %v82 = vmul.f32 %v80, %v49
  %v83 = vadd.f32 %v82, %v55
  %s84 = scalar_lea.vmem %s4, 8
  %85 = vst [vmem:[%s84] sm:$0xff] %v83
  // Predicated region
  $region18: #{factorized_reduce.3} parent=0 // pred_check
    _
  $region19: #{factorized_reduce.3} parent=0 // pred_check_branch
    %87 = sbr.rel (0) target = $region21
  $region20: #{factorized_reduce.3} parent=0 // pred_region
    _
  $region21: #{factorized_reduce.3} parent=0 // pred_fallthru
    _
  // Predicated region
  $region22: #{factorized_reduce.3} parent=0 // pred_check
    _
  $region23: #{factorized_reduce.3} parent=0 // pred_check_branch
    %89 = sbr.rel (0) target = $region25
  $region24: #{factorized_reduce.3} parent=0 // pred_region
    _
  $region25: #{factorized_reduce.3} parent=0 // pred_fallthru
    _

</llo_original>
